<compile_context>
chip_gen: v7x
topology: tpu7x:2x2x1
jax: 0.10.0
libtpu: 0.0.40
codegen_flags: <defaults>
</compile_context>

<pallas_src>
import jax
import jax.numpy as jnp
from jax.experimental import pallas as pl
from jax.experimental.pallas import tpu as pltpu


def encoder_kernel(obs_ref, w_eff_ref, b_eff_ref, w_hh_ref, out_ref, gx_ref):
    """Single-invocation LSTM encoder.

    obs_ref  : (T*B, 2)  f32  flattened observed trajectory
    w_eff_ref: (2, 4H)   f32  fused spatial-embedding + input projection,
                              gate columns (i,f,o,g), sigmoid cols pre-scaled 0.5
    b_eff_ref: (1, 4H)   f32  fused bias, same column treatment
    w_hh_ref : (H, 4H)   bf16 hidden->hidden weight, same column treatment
    out_ref  : (1, B, H) f32  final hidden state
    gx_ref   : (T*B, 4H) f32  VMEM scratch: precomputed input-side gate terms
    """
    B = out_ref.shape[1]
    H = out_ref.shape[2]
    TB = obs_ref.shape[0]
    T = TB // B

    # ---- pre-pass: one MXU matmul for every time step's input-side gates ---
    gx_ref[...] = (jnp.dot(obs_ref[...], w_eff_ref[...],
                           preferred_element_type=jnp.float32)
                   + b_eff_ref[...])

    # Column-wise activation selectors (constant, hoisted out of the loop):
    # columns [0, 3H) are sigmoid gates (i, f, o), columns [3H, 4H) are tanh(g).
    col = jax.lax.broadcasted_iota(jnp.int32, (1, 4 * H), 1)
    is_sig = col < 3 * H
    gate_mul = jnp.where(is_sig, 0.5, 1.0).astype(jnp.float32)
    gate_add = jnp.where(is_sig, 0.5, 0.0).astype(jnp.float32)

    h0 = jnp.zeros((B, H), jnp.float32)
    c0 = jnp.zeros((B, H), jnp.float32)

    def step(t, carry):
        h, c = carry
        row = pl.multiple_of(t * B, B)
        gx_t = gx_ref[pl.ds(row, B), :]                       # (B, 4H)

        # bf16 MXU operands, f32 accumulation.  w_hh is re-read from VMEM each
        # step (a few vld cycles, hidden under MXU/EUP latency) rather than
        # held live in vregs across the fully unrolled recurrence.
        # TODO(synk): make w_hh weight-stationary in the MXU with
        # pltpu.matmul_push_rhs / matmul_acc_lhs / matmul_pop once a bundle
        # dump confirms Mosaic re-pushes the RHS every iteration.
        gates = gx_t + jnp.dot(h.astype(jnp.bfloat16), w_hh_ref[...],
                               preferred_element_type=jnp.float32)

        # sigmoid(x) = 0.5*tanh(0.5*x) + 0.5; the 0.5 pre-scale on the sigmoid
        # columns was folded into W_eff / b_eff / W_hh offline, so a single
        # full-width EUP tanh + one VPU FMA gives all four gate activations.
        act = jnp.tanh(gates) * gate_mul + gate_add
        i_g = act[:, 0:H]
        f_g = act[:, H:2 * H]
        o_g = act[:, 2 * H:3 * H]
        g_g = act[:, 3 * H:]

        c_new = f_g * c + i_g * g_g
        h_new = o_g * jnp.tanh(c_new)
        return (h_new, c_new)

    h_fin, _ = jax.lax.fori_loop(0, T, step, (h0, c0), unroll=True)
    out_ref[0] = h_fin.astype(out_ref.dtype)


def _fold_gate_columns(x):
    """PyTorch LSTM gate order (i, f, g, o) -> (i, f, o, g) along the last
    axis, pre-scaling the sigmoid gates (i, f, o) by 0.5 so that the in-kernel
    sigmoid(x) = 0.5*tanh(0.5*x) + 0.5 needs no extra pre-scale multiply."""
    i, f, g, o = jnp.split(x, 4, axis=-1)
    return jnp.concatenate([0.5 * i, 0.5 * f, 0.5 * o, g], axis=-1)


def encoder_forward(obs, w_emb_t, b_emb, w_ih_t, w_hh_t, b_ih, b_hh):
    """obs: (T, B, 2) f32 -> final_h: (1, B, H) f32."""
    T, B, _ = obs.shape
    H = w_hh_t.shape[0]

    # Offline parameter folding (once per model, tiny): spatial embedding into
    # the input projection, gate reorder + sigmoid pre-scale, bf16 weights.
    w_eff = _fold_gate_columns(w_emb_t @ w_ih_t)                   # (2, 4H) f32
    b_eff = _fold_gate_columns(b_emb @ w_ih_t + b_ih + b_hh)       # (4H,)
    b_eff = b_eff.reshape(1, 4 * H)
    w_hh_r = _fold_gate_columns(w_hh_t).astype(jnp.bfloat16)       # (H, 4H) bf16

    obs2d = obs.reshape(T * B, 2)   # flat so the pre-pass is a single matmul

    vmem = pl.BlockSpec(memory_space=pltpu.MemorySpace.VMEM)
    # TODO(synk): for production workloads with many independent trajectories,
    # add a batch-tile grid axis with dimension_semantics=("parallel",) (uses
    # the second TensorCore on v7x) and tile the gx scratch over it; at the
    # current toy sizes a grid would only add ~600-cycle/step bookkeeping.
    return pl.pallas_call(
        encoder_kernel,
        out_shape=jax.ShapeDtypeStruct((1, B, H), jnp.float32),
        in_specs=[vmem, vmem, vmem, vmem],
        out_specs=vmem,
        scratch_shapes=[pltpu.VMEM((T * B, 4 * H), jnp.float32)],
    )(obs2d, w_eff, b_eff, w_hh_r)


def encoder_reference(obs, w_emb_t, b_emb, w_ih_t, w_hh_t, b_ih, b_hh):
    """Pure-JAX f32 reference (matches PyTorch LSTM semantics)."""
    seq, B, _ = obs.shape
    H = w_hh_t.shape[0]
    e = obs @ w_emb_t + b_emb  # (seq, B, E)

    def step(carry, x_t):
        h, c = carry
        gates = x_t @ w_ih_t + h @ w_hh_t + b_ih + b_hh
        i = jax.nn.sigmoid(gates[:, 0:H])
        f = jax.nn.sigmoid(gates[:, H:2 * H])
        g = jnp.tanh(gates[:, 2 * H:3 * H])
        o = jax.nn.sigmoid(gates[:, 3 * H:4 * H])
        c = f * c + i * g
        h = o * jnp.tanh(c)
        return (h, c), None

    h0 = jnp.zeros((B, H), jnp.float32)
    c0 = jnp.zeros((B, H), jnp.float32)
    (h, _), _ = jax.lax.scan(step, (h0, c0), e)
    return h[None]  # (1, B, H)


if __name__ == "__main__":
    obs_len, batch = 8, 8
    embedding_dim, h_dim = 64, 64

    key = jax.random.PRNGKey(0)
    ks = jax.random.split(key, 7)
    scale = 1.0 / jnp.sqrt(h_dim)

    # Deterministic synthetic parameters (shapes match the PyTorch module,
    # stored pre-transposed for right-multiplication).
    w_emb_t = jax.random.uniform(ks[0], (2, embedding_dim),
                                 minval=-scale, maxval=scale, dtype=jnp.float32)
    b_emb = jax.random.uniform(ks[1], (embedding_dim,),
                               minval=-scale, maxval=scale, dtype=jnp.float32)
    w_ih_t = jax.random.uniform(ks[2], (embedding_dim, 4 * h_dim),
                                minval=-scale, maxval=scale, dtype=jnp.float32)
    w_hh_t = jax.random.uniform(ks[3], (h_dim, 4 * h_dim),
                                minval=-scale, maxval=scale, dtype=jnp.float32)
    b_ih = jax.random.uniform(ks[4], (4 * h_dim,),
                              minval=-scale, maxval=scale, dtype=jnp.float32)
    b_hh = jax.random.uniform(ks[5], (4 * h_dim,),
                              minval=-scale, maxval=scale, dtype=jnp.float32)

    obs_traj = jax.random.normal(ks[6], (obs_len, batch, 2), dtype=jnp.float32)

    final_h = encoder_forward(obs_traj, w_emb_t, b_emb, w_ih_t, w_hh_t,
                              b_ih, b_hh)
    final_h = jax.block_until_ready(final_h)

    ref = encoder_reference(obs_traj, w_emb_t, b_emb, w_ih_t, w_hh_t,
                            b_ih, b_hh)
    assert final_h.shape == (1, batch, h_dim)
    # Tolerance relaxed vs. the pure-f32 path because the recurrent matmul now
    # uses bf16 MXU operands (f32 accumulation keeps the LSTM stable).
    assert jnp.allclose(final_h, ref, atol=2e-2, rtol=2e-2)
    print("KERNEL_OK")
</pallas_src>

<mosaic_0001>
module attributes {stable_mosaic.version = 11 : i64} {
  func.func @encoder_kernel(%arg0: memref<64x2xf32, #tpu.memory_space<vmem>>, %arg1: memref<2x256xf32, #tpu.memory_space<vmem>>, %arg2: memref<1x256xf32, #tpu.memory_space<vmem>>, %arg3: memref<64x256xbf16, #tpu.memory_space<vmem>>, %arg4: memref<1x8x64xf32, #tpu.memory_space<vmem>>, %arg5: memref<64x256xf32, #tpu.memory_space<vmem>>) attributes {dimension_semantics = [], scalar_prefetch = 0 : i64, scratch_operands = 1 : i64, tpu.core_type = #tpu.core_type<tc>} {
    %c0 = arith.constant 0 : index
    %c0_0 = arith.constant 0 : index
    %0 = vector.load %arg0[%c0, %c0_0] : memref<64x2xf32, #tpu.memory_space<vmem>>, vector<64x2xf32>
    %c0_1 = arith.constant 0 : index
    %c0_2 = arith.constant 0 : index
    %1 = vector.load %arg1[%c0_1, %c0_2] : memref<2x256xf32, #tpu.memory_space<vmem>>, vector<2x256xf32>
    %cst = arith.constant dense<0.000000e+00> : vector<64x256xf32>
    %2 = tpu.matmul %0, %1, %cst {dimension_numbers = #tpu.dot_dimension_numbers<[1], [0], [0], [1], [0, 0, 1, 1], [], []>} : vector<64x2xf32>, vector<2x256xf32>, vector<64x256xf32> -> vector<64x256xf32>
    %c0_3 = arith.constant 0 : index
    %c0_4 = arith.constant 0 : index
    %3 = vector.load %arg2[%c0_3, %c0_4] : memref<1x256xf32, #tpu.memory_space<vmem>>, vector<1x256xf32>
    %4 = vector.broadcast %3 : vector<1x256xf32> to vector<64x256xf32>
    %5 = arith.addf %2, %4 : vector<64x256xf32>
    %c0_5 = arith.constant 0 : index
    %c0_6 = arith.constant 0 : index
    %6 = vector.load %arg5[%c0_5, %c0_6] : memref<64x256xf32, #tpu.memory_space<vmem>>, vector<64x256xf32>
    tpu.vector_store %arg5[%c0_5, %c0_6], %5 {strides = array<i32>} : memref<64x256xf32, #tpu.memory_space<vmem>>, vector<64x256xf32>,
    %7 = tpu.iota {dimensions = array<i32: 1>} : vector<1x256xi32>
    %c192_i32 = arith.constant 192 : i32
    %8 = vector.broadcast %c192_i32 : i32 to vector<1x256xi32>
    %9 = arith.cmpi slt, %7, %8 : vector<1x256xi32>
    %cst_7 = arith.constant 5.000000e-01 : f32
    %cst_8 = arith.constant 1.000000e+00 : f32
    %10 = vector.broadcast %cst_7 : f32 to vector<1x256xf32>
    %11 = vector.broadcast %cst_8 : f32 to vector<1x256xf32>
    %12 = arith.select %9, %10, %11 : vector<1x256xi1>, vector<1x256xf32>
    %cst_9 = arith.constant 5.000000e-01 : f32
    %cst_10 = arith.constant 0.000000e+00 : f32
    %13 = vector.broadcast %cst_9 : f32 to vector<1x256xf32>
    %14 = vector.broadcast %cst_10 : f32 to vector<1x256xf32>
    %15 = arith.select %9, %13, %14 : vector<1x256xi1>, vector<1x256xf32>
    %cst_11 = arith.constant 0.000000e+00 : f32
    %16 = vector.broadcast %cst_11 : f32 to vector<8x64xf32>
    %cst_12 = arith.constant 0.000000e+00 : f32
    %17 = vector.broadcast %cst_12 : f32 to vector<8x64xf32>
    %c0_i32 = arith.constant 0 : i32
    %c8_i32 = arith.constant 8 : i32
    %18 = arith.muli %c0_i32, %c8_i32 : i32
    %19 = tpu.assume_multiple %18, 8 : i32
    %20 = arith.index_cast %19 : i32 to index
    %c0_13 = arith.constant 0 : index
    %21 = vector.load %arg5[%20, %c0_13] : memref<64x256xf32, #tpu.memory_space<vmem>>, vector<8x256xf32>
    %22 = arith.truncf %16 : vector<8x64xf32> to vector<8x64xbf16>
    %c0_14 = arith.constant 0 : index
    %c0_15 = arith.constant 0 : index
    %23 = vector.load %arg3[%c0_14, %c0_15] : memref<64x256xbf16, #tpu.memory_space<vmem>>, vector<64x256xbf16>
    %cst_16 = arith.constant dense<0.000000e+00> : vector<8x256xf32>
    %24 = tpu.matmul %22, %23, %cst_16 {dimension_numbers = #tpu.dot_dimension_numbers<[1], [0], [0], [1], [0, 0, 1, 1], [], []>} : vector<8x64xbf16>, vector<64x256xbf16>, vector<8x256xf32> -> vector<8x256xf32>
    %25 = arith.addf %21, %24 : vector<8x256xf32>
    %26 = math.tanh %25 : vector<8x256xf32>
    %27 = vector.broadcast %12 : vector<1x256xf32> to vector<8x256xf32>
    %28 = arith.mulf %26, %27 : vector<8x256xf32>
    %29 = vector.broadcast %15 : vector<1x256xf32> to vector<8x256xf32>
    %30 = arith.addf %28, %29 : vector<8x256xf32>
    %31 = vector.extract_strided_slice %30 {offsets = [0, 0], sizes = [8, 64], strides = [1, 1]} : vector<8x256xf32> to vector<8x64xf32>
    %32 = vector.extract_strided_slice %30 {offsets = [0, 64], sizes = [8, 64], strides = [1, 1]} : vector<8x256xf32> to vector<8x64xf32>
    %33 = vector.extract_strided_slice %30 {offsets = [0, 128], sizes = [8, 64], strides = [1, 1]} : vector<8x256xf32> to vector<8x64xf32>
    %34 = vector.extract_strided_slice %30 {offsets = [0, 192], sizes = [8, 64], strides = [1, 1]} : vector<8x256xf32> to vector<8x64xf32>
    %35 = arith.mulf %32, %17 : vector<8x64xf32>
    %36 = arith.mulf %31, %34 : vector<8x64xf32>
    %37 = arith.addf %35, %36 : vector<8x64xf32>
    %38 = math.tanh %37 : vector<8x64xf32>
    %39 = arith.mulf %33, %38 : vector<8x64xf32>
    %c1_i32 = arith.constant 1 : i32
    %c8_i32_17 = arith.constant 8 : i32
    %40 = arith.muli %c1_i32, %c8_i32_17 : i32
    %41 = tpu.assume_multiple %40, 8 : i32
    %42 = arith.index_cast %41 : i32 to index
    %c0_18 = arith.constant 0 : index
    %43 = vector.load %arg5[%42, %c0_18] : memref<64x256xf32, #tpu.memory_space<vmem>>, vector<8x256xf32>
    %44 = arith.truncf %39 : vector<8x64xf32> to vector<8x64xbf16>
    %c0_19 = arith.constant 0 : index
    %c0_20 = arith.constant 0 : index
    %45 = vector.load %arg3[%c0_19, %c0_20] : memref<64x256xbf16, #tpu.memory_space<vmem>>, vector<64x256xbf16>
    %cst_21 = arith.constant dense<0.000000e+00> : vector<8x256xf32>
    %46 = tpu.matmul %44, %45, %cst_21 {dimension_numbers = #tpu.dot_dimension_numbers<[1], [0], [0], [1], [0, 0, 1, 1], [], []>} : vector<8x64xbf16>, vector<64x256xbf16>, vector<8x256xf32> -> vector<8x256xf32>
    %47 = arith.addf %43, %46 : vector<8x256xf32>
    %48 = math.tanh %47 : vector<8x256xf32>
    %49 = vector.broadcast %12 : vector<1x256xf32> to vector<8x256xf32>
    %50 = arith.mulf %48, %49 : vector<8x256xf32>
    %51 = vector.broadcast %15 : vector<1x256xf32> to vector<8x256xf32>
    %52 = arith.addf %50, %51 : vector<8x256xf32>
    %53 = vector.extract_strided_slice %52 {offsets = [0, 0], sizes = [8, 64], strides = [1, 1]} : vector<8x256xf32> to vector<8x64xf32>
    %54 = vector.extract_strided_slice %52 {offsets = [0, 64], sizes = [8, 64], strides = [1, 1]} : vector<8x256xf32> to vector<8x64xf32>
    %55 = vector.extract_strided_slice %52 {offsets = [0, 128], sizes = [8, 64], strides = [1, 1]} : vector<8x256xf32> to vector<8x64xf32>
    %56 = vector.extract_strided_slice %52 {offsets = [0, 192], sizes = [8, 64], strides = [1, 1]} : vector<8x256xf32> to vector<8x64xf32>
    %57 = arith.mulf %54, %37 : vector<8x64xf32>
    %58 = arith.mulf %53, %56 : vector<8x64xf32>
    %59 = arith.addf %57, %58 : vector<8x64xf32>
    %60 = math.tanh %59 : vector<8x64xf32>
    %61 = arith.mulf %55, %60 : vector<8x64xf32>
    %c2_i32 = arith.constant 2 : i32
    %c8_i32_22 = arith.constant 8 : i32
    %62 = arith.muli %c2_i32, %c8_i32_22 : i32
    %63 = tpu.assume_multiple %62, 8 : i32
    %64 = arith.index_cast %63 : i32 to index
    %c0_23 = arith.constant 0 : index
    %65 = vector.load %arg5[%64, %c0_23] : memref<64x256xf32, #tpu.memory_space<vmem>>, vector<8x256xf32>
    %66 = arith.truncf %61 : vector<8x64xf32> to vector<8x64xbf16>
    %c0_24 = arith.constant 0 : index
    %c0_25 = arith.constant 0 : index
    %67 = vector.load %arg3[%c0_24, %c0_25] : memref<64x256xbf16, #tpu.memory_space<vmem>>, vector<64x256xbf16>
    %cst_26 = arith.constant dense<0.000000e+00> : vector<8x256xf32>
    %68 = tpu.matmul %66, %67, %cst_26 {dimension_numbers = #tpu.dot_dimension_numbers<[1], [0], [0], [1], [0, 0, 1, 1], [], []>} : vector<8x64xbf16>, vector<64x256xbf16>, vector<8x256xf32> -> vector<8x256xf32>
    %69 = arith.addf %65, %68 : vector<8x256xf32>
    %70 = math.tanh %69 : vector<8x256xf32>
    %71 = vector.broadcast %12 : vector<1x256xf32> to vector<8x256xf32>
    %72 = arith.mulf %70, %71 : vector<8x256xf32>
    %73 = vector.broadcast %15 : vector<1x256xf32> to vector<8x256xf32>
    %74 = arith.addf %72, %73 : vector<8x256xf32>
    %75 = vector.extract_strided_slice %74 {offsets = [0, 0], sizes = [8, 64], strides = [1, 1]} : vector<8x256xf32> to vector<8x64xf32>
    %76 = vector.extract_strided_slice %74 {offsets = [0, 64], sizes = [8, 64], strides = [1, 1]} : vector<8x256xf32> to vector<8x64xf32>
    %77 = vector.extract_strided_slice %74 {offsets = [0, 128], sizes = [8, 64], strides = [1, 1]} : vector<8x256xf32> to vector<8x64xf32>
    %78 = vector.extract_strided_slice %74 {offsets = [0, 192], sizes = [8, 64], strides = [1, 1]} : vector<8x256xf32> to vector<8x64xf32>
    %79 = arith.mulf %76, %59 : vector<8x64xf32>
    %80 = arith.mulf %75, %78 : vector<8x64xf32>
    %81 = arith.addf %79, %80 : vector<8x64xf32>
    %82 = math.tanh %81 : vector<8x64xf32>
    %83 = arith.mulf %77, %82 : vector<8x64xf32>
    %c3_i32 = arith.constant 3 : i32
    %c8_i32_27 = arith.constant 8 : i32
    %84 = arith.muli %c3_i32, %c8_i32_27 : i32
    %85 = tpu.assume_multiple %84, 8 : i32
    %86 = arith.index_cast %85 : i32 to index
    %c0_28 = arith.constant 0 : index
    %87 = vector.load %arg5[%86, %c0_28] : memref<64x256xf32, #tpu.memory_space<vmem>>, vector<8x256xf32>
    %88 = arith.truncf %83 : vector<8x64xf32> to vector<8x64xbf16>
    %c0_29 = arith.constant 0 : index
    %c0_30 = arith.constant 0 : index
    %89 = vector.load %arg3[%c0_29, %c0_30] : memref<64x256xbf16, #tpu.memory_space<vmem>>, vector<64x256xbf16>
    %cst_31 = arith.constant dense<0.000000e+00> : vector<8x256xf32>
    %90 = tpu.matmul %88, %89, %cst_31 {dimension_numbers = #tpu.dot_dimension_numbers<[1], [0], [0], [1], [0, 0, 1, 1], [], []>} : vector<8x64xbf16>, vector<64x256xbf16>, vector<8x256xf32> -> vector<8x256xf32>
    %91 = arith.addf %87, %90 : vector<8x256xf32>
    %92 = math.tanh %91 : vector<8x256xf32>
    %93 = vector.broadcast %12 : vector<1x256xf32> to vector<8x256xf32>
    %94 = arith.mulf %92, %93 : vector<8x256xf32>
    %95 = vector.broadcast %15 : vector<1x256xf32> to vector<8x256xf32>
    %96 = arith.addf %94, %95 : vector<8x256xf32>
    %97 = vector.extract_strided_slice %96 {offsets = [0, 0], sizes = [8, 64], strides = [1, 1]} : vector<8x256xf32> to vector<8x64xf32>
    %98 = vector.extract_strided_slice %96 {offsets = [0, 64], sizes = [8, 64], strides = [1, 1]} : vector<8x256xf32> to vector<8x64xf32>
    %99 = vector.extract_strided_slice %96 {offsets = [0, 128], sizes = [8, 64], strides = [1, 1]} : vector<8x256xf32> to vector<8x64xf32>
    %100 = vector.extract_strided_slice %96 {offsets = [0, 192], sizes = [8, 64], strides = [1, 1]} : vector<8x256xf32> to vector<8x64xf32>
    %101 = arith.mulf %98, %81 : vector<8x64xf32>
    %102 = arith.mulf %97, %100 : vector<8x64xf32>
    %103 = arith.addf %101, %102 : vector<8x64xf32>
    %104 = math.tanh %103 : vector<8x64xf32>
    %105 = arith.mulf %99, %104 : vector<8x64xf32>
    %c4_i32 = arith.constant 4 : i32
    %c8_i32_32 = arith.constant 8 : i32
    %106 = arith.muli %c4_i32, %c8_i32_32 : i32
    %107 = tpu.assume_multiple %106, 8 : i32
    %108 = arith.index_cast %107 : i32 to index
    %c0_33 = arith.constant 0 : index
    %109 = vector.load %arg5[%108, %c0_33] : memref<64x256xf32, #tpu.memory_space<vmem>>, vector<8x256xf32>
    %110 = arith.truncf %105 : vector<8x64xf32> to vector<8x64xbf16>
    %c0_34 = arith.constant 0 : index
    %c0_35 = arith.constant 0 : index
    %111 = vector.load %arg3[%c0_34, %c0_35] : memref<64x256xbf16, #tpu.memory_space<vmem>>, vector<64x256xbf16>
    %cst_36 = arith.constant dense<0.000000e+00> : vector<8x256xf32>
    %112 = tpu.matmul %110, %111, %cst_36 {dimension_numbers = #tpu.dot_dimension_numbers<[1], [0], [0], [1], [0, 0, 1, 1], [], []>} : vector<8x64xbf16>, vector<64x256xbf16>, vector<8x256xf32> -> vector<8x256xf32>
    %113 = arith.addf %109, %112 : vector<8x256xf32>
    %114 = math.tanh %113 : vector<8x256xf32>
    %115 = vector.broadcast %12 : vector<1x256xf32> to vector<8x256xf32>
    %116 = arith.mulf %114, %115 : vector<8x256xf32>
    %117 = vector.broadcast %15 : vector<1x256xf32> to vector<8x256xf32>
    %118 = arith.addf %116, %117 : vector<8x256xf32>
    %119 = vector.extract_strided_slice %118 {offsets = [0, 0], sizes = [8, 64], strides = [1, 1]} : vector<8x256xf32> to vector<8x64xf32>
    %120 = vector.extract_strided_slice %118 {offsets = [0, 64], sizes = [8, 64], strides = [1, 1]} : vector<8x256xf32> to vector<8x64xf32>
    %121 = vector.extract_strided_slice %118 {offsets = [0, 128], sizes = [8, 64], strides = [1, 1]} : vector<8x256xf32> to vector<8x64xf32>
    %122 = vector.extract_strided_slice %118 {offsets = [0, 192], sizes = [8, 64], strides = [1, 1]} : vector<8x256xf32> to vector<8x64xf32>
    %123 = arith.mulf %120, %103 : vector<8x64xf32>
    %124 = arith.mulf %119, %122 : vector<8x64xf32>
    %125 = arith.addf %123, %124 : vector<8x64xf32>
    %126 = math.tanh %125 : vector<8x64xf32>
    %127 = arith.mulf %121, %126 : vector<8x64xf32>
    %c5_i32 = arith.constant 5 : i32
    %c8_i32_37 = arith.constant 8 : i32
    %128 = arith.muli %c5_i32, %c8_i32_37 : i32
    %129 = tpu.assume_multiple %128, 8 : i32
    %130 = arith.index_cast %129 : i32 to index
    %c0_38 = arith.constant 0 : index
    %131 = vector.load %arg5[%130, %c0_38] : memref<64x256xf32, #tpu.memory_space<vmem>>, vector<8x256xf32>
    %132 = arith.truncf %127 : vector<8x64xf32> to vector<8x64xbf16>
    %c0_39 = arith.constant 0 : index
    %c0_40 = arith.constant 0 : index
    %133 = vector.load %arg3[%c0_39, %c0_40] : memref<64x256xbf16, #tpu.memory_space<vmem>>, vector<64x256xbf16>
    %cst_41 = arith.constant dense<0.000000e+00> : vector<8x256xf32>
    %134 = tpu.matmul %132, %133, %cst_41 {dimension_numbers = #tpu.dot_dimension_numbers<[1], [0], [0], [1], [0, 0, 1, 1], [], []>} : vector<8x64xbf16>, vector<64x256xbf16>, vector<8x256xf32> -> vector<8x256xf32>
    %135 = arith.addf %131, %134 : vector<8x256xf32>
    %136 = math.tanh %135 : vector<8x256xf32>
    %137 = vector.broadcast %12 : vector<1x256xf32> to vector<8x256xf32>
    %138 = arith.mulf %136, %137 : vector<8x256xf32>
    %139 = vector.broadcast %15 : vector<1x256xf32> to vector<8x256xf32>
    %140 = arith.addf %138, %139 : vector<8x256xf32>
    %141 = vector.extract_strided_slice %140 {offsets = [0, 0], sizes = [8, 64], strides = [1, 1]} : vector<8x256xf32> to vector<8x64xf32>
    %142 = vector.extract_strided_slice %140 {offsets = [0, 64], sizes = [8, 64], strides = [1, 1]} : vector<8x256xf32> to vector<8x64xf32>
    %143 = vector.extract_strided_slice %140 {offsets = [0, 128], sizes = [8, 64], strides = [1, 1]} : vector<8x256xf32> to vector<8x64xf32>
    %144 = vector.extract_strided_slice %140 {offsets = [0, 192], sizes = [8, 64], strides = [1, 1]} : vector<8x256xf32> to vector<8x64xf32>
    %145 = arith.mulf %142, %125 : vector<8x64xf32>
    %146 = arith.mulf %141, %144 : vector<8x64xf32>
    %147 = arith.addf %145, %146 : vector<8x64xf32>
    %148 = math.tanh %147 : vector<8x64xf32>
    %149 = arith.mulf %143, %148 : vector<8x64xf32>
    %c6_i32 = arith.constant 6 : i32
    %c8_i32_42 = arith.constant 8 : i32
    %150 = arith.muli %c6_i32, %c8_i32_42 : i32
    %151 = tpu.assume_multiple %150, 8 : i32
    %152 = arith.index_cast %151 : i32 to index
    %c0_43 = arith.constant 0 : index
    %153 = vector.load %arg5[%152, %c0_43] : memref<64x256xf32, #tpu.memory_space<vmem>>, vector<8x256xf32>
    %154 = arith.truncf %149 : vector<8x64xf32> to vector<8x64xbf16>
    %c0_44 = arith.constant 0 : index
    %c0_45 = arith.constant 0 : index
    %155 = vector.load %arg3[%c0_44, %c0_45] : memref<64x256xbf16, #tpu.memory_space<vmem>>, vector<64x256xbf16>
    %cst_46 = arith.constant dense<0.000000e+00> : vector<8x256xf32>
    %156 = tpu.matmul %154, %155, %cst_46 {dimension_numbers = #tpu.dot_dimension_numbers<[1], [0], [0], [1], [0, 0, 1, 1], [], []>} : vector<8x64xbf16>, vector<64x256xbf16>, vector<8x256xf32> -> vector<8x256xf32>
    %157 = arith.addf %153, %156 : vector<8x256xf32>
    %158 = math.tanh %157 : vector<8x256xf32>
    %159 = vector.broadcast %12 : vector<1x256xf32> to vector<8x256xf32>
    %160 = arith.mulf %158, %159 : vector<8x256xf32>
    %161 = vector.broadcast %15 : vector<1x256xf32> to vector<8x256xf32>
    %162 = arith.addf %160, %161 : vector<8x256xf32>
    %163 = vector.extract_strided_slice %162 {offsets = [0, 0], sizes = [8, 64], strides = [1, 1]} : vector<8x256xf32> to vector<8x64xf32>
    %164 = vector.extract_strided_slice %162 {offsets = [0, 64], sizes = [8, 64], strides = [1, 1]} : vector<8x256xf32> to vector<8x64xf32>
    %165 = vector.extract_strided_slice %162 {offsets = [0, 128], sizes = [8, 64], strides = [1, 1]} : vector<8x256xf32> to vector<8x64xf32>
    %166 = vector.extract_strided_slice %162 {offsets = [0, 192], sizes = [8, 64], strides = [1, 1]} : vector<8x256xf32> to vector<8x64xf32>
    %167 = arith.mulf %164, %147 : vector<8x64xf32>
    %168 = arith.mulf %163, %166 : vector<8x64xf32>
    %169 = arith.addf %167, %168 : vector<8x64xf32>
    %170 = math.tanh %169 : vector<8x64xf32>
    %171 = arith.mulf %165, %170 : vector<8x64xf32>
    %c7_i32 = arith.constant 7 : i32
    %c8_i32_47 = arith.constant 8 : i32
    %172 = arith.muli %c7_i32, %c8_i32_47 : i32
    %173 = tpu.assume_multiple %172, 8 : i32
    %174 = arith.index_cast %173 : i32 to index
    %c0_48 = arith.constant 0 : index
    %175 = vector.load %arg5[%174, %c0_48] : memref<64x256xf32, #tpu.memory_space<vmem>>, vector<8x256xf32>
    %176 = arith.truncf %171 : vector<8x64xf32> to vector<8x64xbf16>
    %c0_49 = arith.constant 0 : index
    %c0_50 = arith.constant 0 : index
    %177 = vector.load %arg3[%c0_49, %c0_50] : memref<64x256xbf16, #tpu.memory_space<vmem>>, vector<64x256xbf16>
    %cst_51 = arith.constant dense<0.000000e+00> : vector<8x256xf32>
    %178 = tpu.matmul %176, %177, %cst_51 {dimension_numbers = #tpu.dot_dimension_numbers<[1], [0], [0], [1], [0, 0, 1, 1], [], []>} : vector<8x64xbf16>, vector<64x256xbf16>, vector<8x256xf32> -> vector<8x256xf32>
    %179 = arith.addf %175, %178 : vector<8x256xf32>
    %180 = math.tanh %179 : vector<8x256xf32>
    %181 = vector.broadcast %12 : vector<1x256xf32> to vector<8x256xf32>
    %182 = arith.mulf %180, %181 : vector<8x256xf32>
    %183 = vector.broadcast %15 : vector<1x256xf32> to vector<8x256xf32>
    %184 = arith.addf %182, %183 : vector<8x256xf32>
    %185 = vector.extract_strided_slice %184 {offsets = [0, 0], sizes = [8, 64], strides = [1, 1]} : vector<8x256xf32> to vector<8x64xf32>
    %186 = vector.extract_strided_slice %184 {offsets = [0, 64], sizes = [8, 64], strides = [1, 1]} : vector<8x256xf32> to vector<8x64xf32>
    %187 = vector.extract_strided_slice %184 {offsets = [0, 128], sizes = [8, 64], strides = [1, 1]} : vector<8x256xf32> to vector<8x64xf32>
    %188 = vector.extract_strided_slice %184 {offsets = [0, 192], sizes = [8, 64], strides = [1, 1]} : vector<8x256xf32> to vector<8x64xf32>
    %189 = arith.mulf %186, %169 : vector<8x64xf32>
    %190 = arith.mulf %185, %188 : vector<8x64xf32>
    %191 = arith.addf %189, %190 : vector<8x64xf32>
    %192 = math.tanh %191 : vector<8x64xf32>
    %193 = arith.mulf %187, %192 : vector<8x64xf32>
    %c8_i32_52 = arith.constant 8 : i32
    %c0_53 = arith.constant 0 : index
    %c0_54 = arith.constant 0 : index
    %c0_55 = arith.constant 0 : index
    %194 = vector.load %arg4[%c0_53, %c0_54, %c0_55] : memref<1x8x64xf32, #tpu.memory_space<vmem>>, vector<1x8x64xf32>
    %195 = vector.shape_cast %194 : vector<1x8x64xf32> to vector<8x64xf32>
    %196 = vector.shape_cast %193 : vector<8x64xf32> to vector<1x8x64xf32>
    tpu.vector_store %arg4[%c0_53, %c0_54, %c0_55], %196 {strides = array<i32>} : memref<1x8x64xf32, #tpu.memory_space<vmem>>, vector<1x8x64xf32>,
    return
  }
}

</mosaic_0001>

<llo_original>
// kernel: tpu_custom_call.1
$region0: #{tpu_custom_call.1}
  #allocation0 [shape = 'u32[]', space=smem, size = 0x4, offset = 0x4, fixed_abs, tag = 'smem constant byte address 0x4 - core index']
  #allocation1 [shape = 'u32[144,128]{1,0:T(1,128)}', space=vmem, size = 0x12000, scoped, tag = 'internal scratch']
  #allocation2 [shape = 'f32[64,256]{1,0:T(8,128)}', space=vmem, size = 0x10000, scoped, tag = 'scratch operand']
  %s0 = inlined_call_operand.vmem [shape: f32[64,2], index: 0, kind: input, shape index: {}]
  %s1 = inlined_call_operand.vmem [shape: f32[2,256], index: 1, kind: input, shape index: {}]
  %s2 = inlined_call_operand.vmem [shape: f32[1,256], index: 2, kind: input, shape index: {}]
  %s3 = inlined_call_operand.vmem [shape: bf16[64,256], index: 3, kind: input, shape index: {}]
  %s4 = inlined_call_operand.hbm [shape: f32[1,8,64], index: 4, kind: output, shape index: {}]
  %s5 = sld [smem:[#allocation0]]
  $region26: #{tpu_custom_call.1} parent=0
    _
  %s7 = ssub.s32 1, %s5
  %s8 = scalar_select 0, %s7, %s5
  $region1: #{tpu_custom_call.1} parent=0
    #allocation3 [shape = 'u8[4096]{0}', space=vmem, size = 0x1000, scoped, tag = 'output window, operand 0, single buffered']
    #allocation4 [shape = 's32[1]{0}', space=sflag, size = 0x4, scoped, tag = 'scoped memory for tpu_custom_call.1']
    %9 = vsyncpa [#allocation4], 0
    // Predicated region
    $region2: #{tpu_custom_call.1} parent=1 // pred_check
      _
    $region3: #{tpu_custom_call.1} parent=1 // pred_check_branch
      %11 = sbr.rel (0) target = $region5
    $region4: #{tpu_custom_call.1} parent=1 // pred_region
      _
    $region5: #{tpu_custom_call.1} parent=1 // pred_fallthru
      _
    // Predicated region
    $region6: #{tpu_custom_call.1} parent=1 // pred_check
      _
    $region7: #{tpu_custom_call.1} parent=1 // pred_check_branch
      %13 = sbr.rel (0) target = $region9
    $region8: #{tpu_custom_call.1} parent=1 // pred_region
      _
    $region9: #{tpu_custom_call.1} parent=1 // pred_fallthru
      _
    // Predicated region
    $region10: #{tpu_custom_call.1} parent=1 // pred_check
      _
    $region11: #{tpu_custom_call.1} parent=1 // pred_check_branch
      %15 = sbr.rel (0) target = $region13
    $region12: #{tpu_custom_call.1} parent=1 // pred_region
      _
    $region13: #{tpu_custom_call.1} parent=1 // pred_fallthru
      _
    // Predicated region
    $region14: #{tpu_custom_call.1} parent=1 // pred_check
      _
    $region15: #{tpu_custom_call.1} parent=1 // pred_check_branch
      %17 = sbr.rel (0) target = $region17
    $region16: #{tpu_custom_call.1} parent=1 // pred_region
      _
    $region17: #{tpu_custom_call.1} parent=1 // pred_fallthru
      _
    %v19 = vld [vmem:[%s0] sm:$0xff]
    %v20 = vld [vmem:[%s0 + $0x8] sm:$0xff]
    %v21 = vld [vmem:[%s0 + $0x10] sm:$0xff]
    %v22 = vld [vmem:[%s0 + $0x18] sm:$0xff]
    %v23 = vld [vmem:[%s0 + $0x20] sm:$0xff]
    %v24 = vld [vmem:[%s0 + $0x28] sm:$0xff]
    %v25 = vld [vmem:[%s0 + $0x30] sm:$0xff]
    %v26 = vld [vmem:[%s0 + $0x38] sm:$0xff]
    %v27 = vld [vmem:[%s1] sm:$0xf]
    %v28 = vld [vmem:[%s2] sm:$0x3]
    %v30 = vlaneseq
    %v31 = vshrl.u32 %v30, 7
    %v32 = vsub.s32 0, %v31
    %v33 = vrot.slane %v28, %v32
    %v34 = vlaneseq
    %v35 = vshrl.u32 %v34, 7
    %v36 = vsub.s32 1, %v35
    %v37 = vrot.slane %v28, %v36
    %v42 = vunpack.c.l.s4 1983009808
    %v43 = vunpack.c.0.s8 %v42
    %v44 = vlaneseq
    %v45 = vshrl.u32 %v44, 7
    %v46 = vsub.s32 %v43, %v45
    %v47 = vrot.slane %v27, %v46
    %v48 = vcombine.high %v47, %v47
    %vm49 = vcmask 15360
    %v51 = vsel %vm49, %v19, 0
    %v54 = vsel %vm49, %v20, 0
    %v57 = vsel %vm49, %v21, 0
    %v60 = vsel %vm49, %v22, 0
    %v63 = vsel %vm49, %v23, 0
    %v66 = vsel %vm49, %v24, 0
    %v69 = vsel %vm49, %v25, 0
    %v72 = vsel %vm49, %v26, 0
    %vm74 = vcmask 1041408
    %v75 = vsel %vm74, %v47, 0
    %v77 = vsel %vm74, %v48, 0
    %79 = vmatprep.subr.mxu0 %v77
    %80 = vmatpush1.msra.mxu0 %v75
    %81 = vmatprep.subr.mxu0 0.0
    %82 = vmatpush1.msra.mxu0 0.0
    %83 = vmatprep.subr.mxu0 0.0
    %84 = vmatpush1.msra.mxu0 0.0
    %85 = vmatprep.subr.mxu0 0.0
    %86 = vmatpush1.msra.mxu0 0.0
    %87 = vmatprep.subr.mxu0 0.0
    %88 = vmatpush1.msra.mxu0 0.0
    %89 = vmatprep.subr.mxu0 0.0
    %90 = vmatpush1.msra.mxu0 0.0
    %91 = vmatprep.subr.mxu0 0.0
    %92 = vmatpush1.msra.mxu0 0.0
    %93 = vmatprep.subr.mxu0 0.0
    %94 = vmatpush1.msra.mxu0 0.0
    %95 = vmatprep.subr.mxu0 0.0
    %96 = vmatpush1.msra.mxu0 0.0
    %97 = vmatprep.subr.mxu0 0.0
    %98 = vmatpush1.msra.mxu0 0.0
    %99 = vmatprep.subr.mxu0 0.0
    %100 = vmatpush1.msra.mxu0 0.0
    %101 = vmatprep.subr.mxu0 0.0
    %102 = vmatpush1.msra.mxu0 0.0
    %103 = vmatprep.subr.mxu0 0.0
    %104 = vmatpush1.msra.mxu0 0.0
    %105 = vmatprep.subr.mxu0 0.0
    %106 = vmatpush1.msra.mxu0 0.0
    %107 = vmatprep.subr.mxu0 0.0
    %108 = vmatpush1.msra.mxu0 0.0
    %109 = vmatprep.subr.mxu0 0.0
    %110 = vmatpush1.msra.mxu0 0.0
    %111 = vmatprep.subr.mxu0 0.0
    %112 = vmatpush1.msra.mxu0 0.0
    %113 = vmatprep.subr.mxu0 0.0
    %114 = vmatpush1.msra.mxu0 0.0
    %115 = vmatprep.subr.mxu0 0.0
    %116 = vmatpush1.msra.mxu0 0.0
    %117 = vmatprep.subr.mxu0 0.0
    %118 = vmatpush1.msra.mxu0 0.0
    %119 = vmatprep.subr.mxu0 0.0
    %120 = vmatpush1.msra.mxu0 0.0
    %121 = vmatprep.subr.mxu0 0.0
    %122 = vmatpush1.msra.mxu0 0.0
    %123 = vmatprep.subr.mxu0 0.0
    %124 = vmatpush1.msra.mxu0 0.0
    %125 = vmatprep.subr.mxu0 0.0
    %126 = vmatpush1.msra.mxu0 0.0
    %127 = vmatprep.subr.mxu0 0.0
    %128 = vmatpush1.msra.mxu0 0.0
    %129 = vmatprep.subr.mxu0 0.0
    %130 = vmatpush1.msra.mxu0 0.0
    %131 = vmatprep.subr.mxu0 0.0
    %132 = vmatpush1.msra.mxu0 0.0
    %133 = vmatprep.subr.mxu0 0.0
    %134 = vmatpush1.msra.mxu0 0.0
    %135 = vmatprep.subr.mxu0 0.0
    %136 = vmatpush1.msra.mxu0 0.0
    %137 = vmatprep.subr.mxu0 0.0
    %138 = vmatpush1.msra.mxu0 0.0
    %139 = vmatprep.subr.mxu0 0.0
    %140 = vmatpush1.msra.mxu0 0.0
    %141 = vmatprep.subr.mxu0 0.0
    %142 = vmatpush1.msra.mxu0 0.0
    %143 = vmatprep.mubr.f32.mxu0 0.0
    %144 = vmatmul.mubr.f32.gmra.mrb[0].mxu0 %v51
    %v145 = vpop.f32.mrb[0].mxu0
    %v146 = vadd.f32 %v33, %v145
    %v147 = vpop.f32.mrb[0].mxu0
    %v148 = vadd.f32 %v37, %v147
    %149 = vmatprep.mubr.f32.mxu0 0.0
    %150 = vmatmul.mubr.f32.gmra.mrb[0].mxu0 %v54
    %v151 = vpop.f32.mrb[0].mxu0
    %v152 = vadd.f32 %v33, %v151
    %v153 = vpop.f32.mrb[0].mxu0
    %v154 = vadd.f32 %v37, %v153
    %155 = vmatprep.mubr.f32.mxu0 0.0
    %156 = vmatmul.mubr.f32.gmra.mrb[0].mxu0 %v57
    %v157 = vpop.f32.mrb[0].mxu0
    %v158 = vadd.f32 %v33, %v157
    %v159 = vpop.f32.mrb[0].mxu0
    %v160 = vadd.f32 %v37, %v159
    %161 = vmatprep.mubr.f32.mxu0 0.0
    %162 = vmatmul.mubr.f32.gmra.mrb[0].mxu0 %v60
    %v163 = vpop.f32.mrb[0].mxu0
    %v164 = vadd.f32 %v33, %v163
    %v165 = vpop.f32.mrb[0].mxu0
    %v166 = vadd.f32 %v37, %v165
    %167 = vmatprep.mubr.f32.mxu0 0.0
    %168 = vmatmul.mubr.f32.gmra.mrb[0].mxu0 %v63
    %v169 = vpop.f32.mrb[0].mxu0
    %v170 = vadd.f32 %v33, %v169
    %v171 = vpop.f32.mrb[0].mxu0
    %v172 = vadd.f32 %v37, %v171
    %173 = vmatprep.mubr.f32.mxu0 0.0
    %174 = vmatmul.mubr.f32.gmra.mrb[0].mxu0 %v66
    %v175 = vpop.f32.mrb[0].mxu0
    %v176 = vadd.f32 %v33, %v175
    %v177 = vpop.f32.mrb[0].mxu0
    %v178 = vadd.f32 %v37, %v177
    %179 = vmatprep.mubr.f32.mxu0 0.0
    %180 = vmatmul.mubr.f32.gmra.mrb[0].mxu0 %v69
    %v181 = vpop.f32.mrb[0].mxu0
    %v182 = vadd.f32 %v33, %v181
    %v183 = vpop.f32.mrb[0].mxu0
    %v184 = vadd.f32 %v37, %v183
    %185 = vmatprep.mubr.f32.mxu0 0.0
    %186 = vmatmul.mubr.f32.gmra.mrb[0].mxu0 %v72
    %v187 = vpop.f32.mrb[0].mxu0
    %v188 = vadd.f32 %v33, %v187
    %v189 = vpop.f32.mrb[0].mxu0
    %v190 = vadd.f32 %v37, %v189
    %191 = vdwg.mxu0
    %192 = vst [vmem:[#allocation2] sm:$0xff] %v146
    %193 = vst [vmem:[#allocation2 + $0x8] sm:$0xff] %v148
    %194 = vst [vmem:[#allocation2 + $0x10] sm:$0xff] %v152
    %195 = vst [vmem:[#allocation2 + $0x18] sm:$0xff] %v154
    %196 = vst [vmem:[#allocation2 + $0x20] sm:$0xff] %v158
    %197 = vst [vmem:[#allocation2 + $0x28] sm:$0xff] %v160
    %198 = vst [vmem:[#allocation2 + $0x30] sm:$0xff] %v164
    %199 = vst [vmem:[#allocation2 + $0x38] sm:$0xff] %v166
    %200 = vst [vmem:[#allocation2 + $0x40] sm:$0xff] %v170
    %201 = vst [vmem:[#allocation2 + $0x48] sm:$0xff] %v172
    %202 = vst [vmem:[#allocation2 + $0x50] sm:$0xff] %v176
    %203 = vst [vmem:[#allocation2 + $0x58] sm:$0xff] %v178
    %204 = vst [vmem:[#allocation2 + $0x60] sm:$0xff] %v182
    %205 = vst [vmem:[#allocation2 + $0x68] sm:$0xff] %v184
    %206 = vst [vmem:[#allocation2 + $0x70] sm:$0xff] %v188
    %207 = vst [vmem:[#allocation2 + $0x78] sm:$0xff] %v190
    %v208 = vlaneseq
    %v209 = vand.u32 %v208, 127
    %v210 = vadd.s32 %v209, 128
    %vm211 = vcmp.lt.s32.totalorder %v209, 192
    %vm212 = vcmp.lt.s32.totalorder %v210, 192
    %v213 = vsel %vm211, 0.5, 1.0
    %v214 = vsel %vm212, 0.5, 1.0
    %v215 = vsel %vm211, 0.5, 0.0
    %v216 = vsel %vm212, 0.5, 0.0
    %s217 = smul.u32 0, 2
    %s218 = smul.addr %s217, 8
    %s219 = scalar_lea.vmem [#allocation2], %s218
    %v220 = vld [vmem:[%s219] sm:$0xff]
    %v221 = vld [vmem:[%s219 + $0x8] sm:$0xff]
    %v222 = vld [vmem:[%s3] sm:$0xff]
    %v223 = vld [vmem:[%s3 + $0x8] sm:$0xff]
    %v224 = vld [vmem:[%s3 + $0x10] sm:$0xff]
    %v225 = vld [vmem:[%s3 + $0x18] sm:$0xff]
    %v226 = vld [vmem:[%s3 + $0x20] sm:$0xff]
    %v227 = vld [vmem:[%s3 + $0x28] sm:$0xff]
    %v228 = vld [vmem:[%s3 + $0x30] sm:$0xff]
    %v229 = vld [vmem:[%s3 + $0x38] sm:$0xff]
    %v238 = vunpack.c.l.b16 %v222
    %v239 = vunpack.c.h.b16 %v222
    %v240 = vunpack.c.l.b16 %v223
    %v241 = vunpack.c.h.b16 %v223
    %v242 = vunpack.c.l.b16 %v224
    %v243 = vunpack.c.h.b16 %v224
    %v244 = vunpack.c.l.b16 %v225
    %v245 = vunpack.c.h.b16 %v225
    %v246 = vunpack.c.l.b16 %v226
    %v247 = vunpack.c.h.b16 %v226
    %v248 = vunpack.c.l.b16 %v227
    %v249 = vunpack.c.h.b16 %v227
    %v250 = vunpack.c.l.b16 %v228
    %v251 = vunpack.c.h.b16 %v228
    %v252 = vunpack.c.l.b16 %v229
    %v253 = vunpack.c.h.b16 %v229
    %v254 = vpack.c.b16 %v240, %v238
    %v255 = vpack.c.b16 %v241, %v239
    %v256 = vpack.c.b16 %v244, %v242
    %v257 = vpack.c.b16 %v245, %v243
    %v258 = vpack.c.b16 %v248, %v246
    %v259 = vpack.c.b16 %v249, %v247
    %v260 = vpack.c.b16 %v252, %v250
    %v261 = vpack.c.b16 %v253, %v251
    %vm270 = vcmask 523264
    %v272 = vsel %vm270, 0, 0
    %274 = vmatprep.subr.bf16.mxu0 %v255
    %275 = vmatpush1.bf16.msra.mxu0 %v254
    %276 = vmatprep.subr.bf16.mxu0 %v257
    %277 = vmatpush1.bf16.msra.mxu0 %v256
    %278 = vmatprep.subr.bf16.mxu0 %v259
    %279 = vmatpush1.bf16.msra.mxu0 %v258
    %280 = vmatprep.subr.bf16.mxu0 %v261
    %281 = vmatpush1.bf16.msra.mxu0 %v260
    %282 = vmatprep.subr.bf16.mxu0 0
    %283 = vmatpush1.bf16.msra.mxu0 0
    %284 = vmatprep.subr.bf16.mxu0 0
    %285 = vmatpush1.bf16.msra.mxu0 0
    %286 = vmatprep.subr.bf16.mxu0 0
    %287 = vmatpush1.bf16.msra.mxu0 0
    %288 = vmatprep.subr.bf16.mxu0 0
    %289 = vmatpush1.bf16.msra.mxu0 0
    %290 = vmatprep.subr.bf16.mxu0 0
    %291 = vmatpush1.bf16.msra.mxu0 0
    %292 = vmatprep.subr.bf16.mxu0 0
    %293 = vmatpush1.bf16.msra.mxu0 0
    %294 = vmatprep.subr.bf16.mxu0 0
    %295 = vmatpush1.bf16.msra.mxu0 0
    %296 = vmatprep.subr.bf16.mxu0 0
    %297 = vmatpush1.bf16.msra.mxu0 0
    %298 = vmatprep.subr.bf16.mxu0 0
    %299 = vmatpush1.bf16.msra.mxu0 0
    %300 = vmatprep.subr.bf16.mxu0 0
    %301 = vmatpush1.bf16.msra.mxu0 0
    %302 = vmatprep.subr.bf16.mxu0 0
    %303 = vmatpush1.bf16.msra.mxu0 0
    %304 = vmatprep.subr.bf16.mxu0 0
    %305 = vmatpush1.bf16.msra.mxu0 0
    %306 = vmatprep.mubr.bf16.mxu0 0
    %307 = vmatmul.mubr.bf16.gmra.mrb[0].mxu0 %v272
    %v308 = vpop.f32.mrb[0].mxu0
    %v309 = vadd.f32 0.0, %v308
    %v310 = vpop.f32.mrb[0].mxu0
    %v311 = vadd.f32 0.0, %v310
    %v312 = vpop.f32.mrb[0].mxu0
    %v313 = vpop.f32.mrb[0].mxu0
    %314 = vdwg.mxu0
    %v315 = vadd.f32 %v220, %v309
    %v316 = vadd.f32 %v221, %v311
    %v317 = vtanh.pop %v315
    %v318 = vtanh.pop %v316
    %v319 = vmul.f32 %v317, %v213
    %v320 = vmul.f32 %v318, %v214
    %v321 = vadd.f32 %v319, %v215
    %v322 = vadd.f32 %v320, %v216
    %v323 = vmul.f32 %v321, 0.0
    %325 = vrot.lane.b32.xlu0 %v322, 64
    %v326 = vpop.permute.xlu0 %325
    %v328 = vmul.f32 %v321, %v326
    %330 = vrot.lane.b32.xlu0 %v328, 64
    %v331 = vpop.permute.xlu0 %330
    %v333 = vadd.f32 %v323, %v331
    %v334 = vtanh.pop %v333
    %336 = vrot.lane.b32.xlu0 %v334, 64
    %v337 = vpop.permute.xlu0 %336
    %v339 = vmul.f32 %v322, %v337
    %s340 = smul.u32 1, 2
    %s341 = smul.addr %s340, 8
    %s342 = scalar_lea.vmem [#allocation2], %s341
    %v343 = vld [vmem:[%s342] sm:$0xff]
    %v344 = vld [vmem:[%s342 + $0x8] sm:$0xff]
    %v345 = vpack.c.bf16 %v339, %v339
    %v347 = vsel %vm270, %v345, 0
    %349 = vmatprep.subr.bf16.mxu0 %v255
    %350 = vmatpush1.bf16.msra.mxu0 %v254
    %351 = vmatprep.subr.bf16.mxu0 %v257
    %352 = vmatpush1.bf16.msra.mxu0 %v256
    %353 = vmatprep.subr.bf16.mxu0 %v259
    %354 = vmatpush1.bf16.msra.mxu0 %v258
    %355 = vmatprep.subr.bf16.mxu0 %v261
    %356 = vmatpush1.bf16.msra.mxu0 %v260
    %357 = vmatprep.subr.bf16.mxu0 0
    %358 = vmatpush1.bf16.msra.mxu0 0
    %359 = vmatprep.subr.bf16.mxu0 0
    %360 = vmatpush1.bf16.msra.mxu0 0
    %361 = vmatprep.subr.bf16.mxu0 0
    %362 = vmatpush1.bf16.msra.mxu0 0
    %363 = vmatprep.subr.bf16.mxu0 0
    %364 = vmatpush1.bf16.msra.mxu0 0
    %365 = vmatprep.subr.bf16.mxu0 0
    %366 = vmatpush1.bf16.msra.mxu0 0
    %367 = vmatprep.subr.bf16.mxu0 0
    %368 = vmatpush1.bf16.msra.mxu0 0
    %369 = vmatprep.subr.bf16.mxu0 0
    %370 = vmatpush1.bf16.msra.mxu0 0
    %371 = vmatprep.subr.bf16.mxu0 0
    %372 = vmatpush1.bf16.msra.mxu0 0
    %373 = vmatprep.subr.bf16.mxu0 0
    %374 = vmatpush1.bf16.msra.mxu0 0
    %375 = vmatprep.subr.bf16.mxu0 0
    %376 = vmatpush1.bf16.msra.mxu0 0
    %377 = vmatprep.subr.bf16.mxu0 0
    %378 = vmatpush1.bf16.msra.mxu0 0
    %379 = vmatprep.subr.bf16.mxu0 0
    %380 = vmatpush1.bf16.msra.mxu0 0
    %381 = vmatprep.mubr.bf16.mxu0 0
    %382 = vmatmul.mubr.bf16.gmra.mrb[0].mxu0 %v347
    %v383 = vpop.f32.mrb[0].mxu0
    %v384 = vadd.f32 0.0, %v383
    %v385 = vpop.f32.mrb[0].mxu0
    %v386 = vadd.f32 0.0, %v385
    %v387 = vpop.f32.mrb[0].mxu0
    %v388 = vpop.f32.mrb[0].mxu0
    %389 = vdwg.mxu0
    %v390 = vadd.f32 %v343, %v384
    %v391 = vadd.f32 %v344, %v386
    %v392 = vtanh.pop %v390
    %v393 = vtanh.pop %v391
    %v394 = vmul.f32 %v392, %v213
    %v395 = vmul.f32 %v393, %v214
    %v396 = vadd.f32 %v394, %v215
    %v397 = vadd.f32 %v395, %v216
    %v398 = vmul.f32 %v396, %v333
    %400 = vrot.lane.b32.xlu0 %v397, 64
    %v401 = vpop.permute.xlu0 %400
    %v403 = vmul.f32 %v396, %v401
    %405 = vrot.lane.b32.xlu0 %v403, 64
    %v406 = vpop.permute.xlu0 %405
    %v408 = vadd.f32 %v398, %v406
    %v409 = vtanh.pop %v408
    %411 = vrot.lane.b32.xlu0 %v409, 64
    %v412 = vpop.permute.xlu0 %411
    %v414 = vmul.f32 %v397, %v412
    %s415 = smul.u32 2, 2
    %s416 = smul.addr %s415, 8
    %s417 = scalar_lea.vmem [#allocation2], %s416
    %v418 = vld [vmem:[%s417] sm:$0xff]
    %v419 = vld [vmem:[%s417 + $0x8] sm:$0xff]
    %v420 = vpack.c.bf16 %v414, %v414
    %v422 = vsel %vm270, %v420, 0
    %424 = vmatprep.subr.bf16.mxu0 %v255
    %425 = vmatpush1.bf16.msra.mxu0 %v254
    %426 = vmatprep.subr.bf16.mxu0 %v257
    %427 = vmatpush1.bf16.msra.mxu0 %v256
    %428 = vmatprep.subr.bf16.mxu0 %v259
    %429 = vmatpush1.bf16.msra.mxu0 %v258
    %430 = vmatprep.subr.bf16.mxu0 %v261
    %431 = vmatpush1.bf16.msra.mxu0 %v260
    %432 = vmatprep.subr.bf16.mxu0 0
    %433 = vmatpush1.bf16.msra.mxu0 0
    %434 = vmatprep.subr.bf16.mxu0 0
    %435 = vmatpush1.bf16.msra.mxu0 0
    %436 = vmatprep.subr.bf16.mxu0 0
    %437 = vmatpush1.bf16.msra.mxu0 0
    %438 = vmatprep.subr.bf16.mxu0 0
    %439 = vmatpush1.bf16.msra.mxu0 0
    %440 = vmatprep.subr.bf16.mxu0 0
    %441 = vmatpush1.bf16.msra.mxu0 0
    %442 = vmatprep.subr.bf16.mxu0 0
    %443 = vmatpush1.bf16.msra.mxu0 0
    %444 = vmatprep.subr.bf16.mxu0 0
    %445 = vmatpush1.bf16.msra.mxu0 0
    %446 = vmatprep.subr.bf16.mxu0 0
    %447 = vmatpush1.bf16.msra.mxu0 0
    %448 = vmatprep.subr.bf16.mxu0 0
    %449 = vmatpush1.bf16.msra.mxu0 0
    %450 = vmatprep.subr.bf16.mxu0 0
    %451 = vmatpush1.bf16.msra.mxu0 0
    %452 = vmatprep.subr.bf16.mxu0 0
    %453 = vmatpush1.bf16.msra.mxu0 0
    %454 = vmatprep.subr.bf16.mxu0 0
    %455 = vmatpush1.bf16.msra.mxu0 0
    %456 = vmatprep.mubr.bf16.mxu0 0
    %457 = vmatmul.mubr.bf16.gmra.mrb[0].mxu0 %v422
    %v458 = vpop.f32.mrb[0].mxu0
    %v459 = vadd.f32 0.0, %v458
    %v460 = vpop.f32.mrb[0].mxu0
    %v461 = vadd.f32 0.0, %v460
    %v462 = vpop.f32.mrb[0].mxu0
    %v463 = vpop.f32.mrb[0].mxu0
    %464 = vdwg.mxu0
    %v465 = vadd.f32 %v418, %v459
    %v466 = vadd.f32 %v419, %v461
    %v467 = vtanh.pop %v465
    %v468 = vtanh.pop %v466
    %v469 = vmul.f32 %v467, %v213
    %v470 = vmul.f32 %v468, %v214
    %v471 = vadd.f32 %v469, %v215
    %v472 = vadd.f32 %v470, %v216
    %v473 = vmul.f32 %v471, %v408
    %475 = vrot.lane.b32.xlu0 %v472, 64
    %v476 = vpop.permute.xlu0 %475
    %v478 = vmul.f32 %v471, %v476
    %480 = vrot.lane.b32.xlu0 %v478, 64
    %v481 = vpop.permute.xlu0 %480
    %v483 = vadd.f32 %v473, %v481
    %v484 = vtanh.pop %v483
    %486 = vrot.lane.b32.xlu0 %v484, 64
    %v487 = vpop.permute.xlu0 %486
    %v489 = vmul.f32 %v472, %v487
    %s490 = smul.u32 3, 2
    %s491 = smul.addr %s490, 8
    %s492 = scalar_lea.vmem [#allocation2], %s491
    %v493 = vld [vmem:[%s492] sm:$0xff]
    %v494 = vld [vmem:[%s492 + $0x8] sm:$0xff]
    %v495 = vpack.c.bf16 %v489, %v489
    %v497 = vsel %vm270, %v495, 0
    %499 = vmatprep.subr.bf16.mxu0 %v255
    %500 = vmatpush1.bf16.msra.mxu0 %v254
    %501 = vmatprep.subr.bf16.mxu0 %v257
    %502 = vmatpush1.bf16.msra.mxu0 %v256
    %503 = vmatprep.subr.bf16.mxu0 %v259
    %504 = vmatpush1.bf16.msra.mxu0 %v258
    %505 = vmatprep.subr.bf16.mxu0 %v261
    %506 = vmatpush1.bf16.msra.mxu0 %v260
    %507 = vmatprep.subr.bf16.mxu0 0
    %508 = vmatpush1.bf16.msra.mxu0 0
    %509 = vmatprep.subr.bf16.mxu0 0
    %510 = vmatpush1.bf16.msra.mxu0 0
    %511 = vmatprep.subr.bf16.mxu0 0
    %512 = vmatpush1.bf16.msra.mxu0 0
    %513 = vmatprep.subr.bf16.mxu0 0
    %514 = vmatpush1.bf16.msra.mxu0 0
    %515 = vmatprep.subr.bf16.mxu0 0
    %516 = vmatpush1.bf16.msra.mxu0 0
    %517 = vmatprep.subr.bf16.mxu0 0
    %518 = vmatpush1.bf16.msra.mxu0 0
    %519 = vmatprep.subr.bf16.mxu0 0
    %520 = vmatpush1.bf16.msra.mxu0 0
    %521 = vmatprep.subr.bf16.mxu0 0
    %522 = vmatpush1.bf16.msra.mxu0 0
    %523 = vmatprep.subr.bf16.mxu0 0
    %524 = vmatpush1.bf16.msra.mxu0 0
    %525 = vmatprep.subr.bf16.mxu0 0
    %526 = vmatpush1.bf16.msra.mxu0 0
    %527 = vmatprep.subr.bf16.mxu0 0
    %528 = vmatpush1.bf16.msra.mxu0 0
    %529 = vmatprep.subr.bf16.mxu0 0
    %530 = vmatpush1.bf16.msra.mxu0 0
    %531 = vmatprep.mubr.bf16.mxu0 0
    %532 = vmatmul.mubr.bf16.gmra.mrb[0].mxu0 %v497
    %v533 = vpop.f32.mrb[0].mxu0
    %v534 = vadd.f32 0.0, %v533
    %v535 = vpop.f32.mrb[0].mxu0
    %v536 = vadd.f32 0.0, %v535
    %v537 = vpop.f32.mrb[0].mxu0
    %v538 = vpop.f32.mrb[0].mxu0
    %539 = vdwg.mxu0
    %v540 = vadd.f32 %v493, %v534
    %v541 = vadd.f32 %v494, %v536
    %v542 = vtanh.pop %v540
    %v543 = vtanh.pop %v541
    %v544 = vmul.f32 %v542, %v213
    %v545 = vmul.f32 %v543, %v214
    %v546 = vadd.f32 %v544, %v215
    %v547 = vadd.f32 %v545, %v216
    %v548 = vmul.f32 %v546, %v483
    %550 = vrot.lane.b32.xlu0 %v547, 64
    %v551 = vpop.permute.xlu0 %550
    %v553 = vmul.f32 %v546, %v551
    %555 = vrot.lane.b32.xlu0 %v553, 64
    %v556 = vpop.permute.xlu0 %555
    %v558 = vadd.f32 %v548, %v556
    %v559 = vtanh.pop %v558
    %561 = vrot.lane.b32.xlu0 %v559, 64
    %v562 = vpop.permute.xlu0 %561
    %v564 = vmul.f32 %v547, %v562
    %s565 = smul.u32 4, 2
    %s566 = smul.addr %s565, 8
    %s567 = scalar_lea.vmem [#allocation2], %s566
    %v568 = vld [vmem:[%s567] sm:$0xff]
    %v569 = vld [vmem:[%s567 + $0x8] sm:$0xff]
    %v570 = vpack.c.bf16 %v564, %v564
    %v572 = vsel %vm270, %v570, 0
    %574 = vmatprep.subr.bf16.mxu0 %v255
    %575 = vmatpush1.bf16.msra.mxu0 %v254
    %576 = vmatprep.subr.bf16.mxu0 %v257
    %577 = vmatpush1.bf16.msra.mxu0 %v256
    %578 = vmatprep.subr.bf16.mxu0 %v259
    %579 = vmatpush1.bf16.msra.mxu0 %v258
    %580 = vmatprep.subr.bf16.mxu0 %v261
    %581 = vmatpush1.bf16.msra.mxu0 %v260
    %582 = vmatprep.subr.bf16.mxu0 0
    %583 = vmatpush1.bf16.msra.mxu0 0
    %584 = vmatprep.subr.bf16.mxu0 0
    %585 = vmatpush1.bf16.msra.mxu0 0
    %586 = vmatprep.subr.bf16.mxu0 0
    %587 = vmatpush1.bf16.msra.mxu0 0
    %588 = vmatprep.subr.bf16.mxu0 0
    %589 = vmatpush1.bf16.msra.mxu0 0
    %590 = vmatprep.subr.bf16.mxu0 0
    %591 = vmatpush1.bf16.msra.mxu0 0
    %592 = vmatprep.subr.bf16.mxu0 0
    %593 = vmatpush1.bf16.msra.mxu0 0
    %594 = vmatprep.subr.bf16.mxu0 0
    %595 = vmatpush1.bf16.msra.mxu0 0
    %596 = vmatprep.subr.bf16.mxu0 0
    %597 = vmatpush1.bf16.msra.mxu0 0
    %598 = vmatprep.subr.bf16.mxu0 0
    %599 = vmatpush1.bf16.msra.mxu0 0
    %600 = vmatprep.subr.bf16.mxu0 0
    %601 = vmatpush1.bf16.msra.mxu0 0
    %602 = vmatprep.subr.bf16.mxu0 0
    %603 = vmatpush1.bf16.msra.mxu0 0
    %604 = vmatprep.subr.bf16.mxu0 0
    %605 = vmatpush1.bf16.msra.mxu0 0
    %606 = vmatprep.mubr.bf16.mxu0 0
    %607 = vmatmul.mubr.bf16.gmra.mrb[0].mxu0 %v572
    %v608 = vpop.f32.mrb[0].mxu0
    %v609 = vadd.f32 0.0, %v608
    %v610 = vpop.f32.mrb[0].mxu0
    %v611 = vadd.f32 0.0, %v610
    %v612 = vpop.f32.mrb[0].mxu0
    %v613 = vpop.f32.mrb[0].mxu0
    %614 = vdwg.mxu0
    %v615 = vadd.f32 %v568, %v609
    %v616 = vadd.f32 %v569, %v611
    %v617 = vtanh.pop %v615
    %v618 = vtanh.pop %v616
    %v619 = vmul.f32 %v617, %v213
    %v620 = vmul.f32 %v618, %v214
    %v621 = vadd.f32 %v619, %v215
    %v622 = vadd.f32 %v620, %v216
    %v623 = vmul.f32 %v621, %v558
    %625 = vrot.lane.b32.xlu0 %v622, 64
    %v626 = vpop.permute.xlu0 %625
    %v628 = vmul.f32 %v621, %v626
    %630 = vrot.lane.b32.xlu0 %v628, 64
    %v631 = vpop.permute.xlu0 %630
    %v633 = vadd.f32 %v623, %v631
    %v634 = vtanh.pop %v633
    %636 = vrot.lane.b32.xlu0 %v634, 64
    %v637 = vpop.permute.xlu0 %636
    %v639 = vmul.f32 %v622, %v637
    %s640 = smul.u32 5, 2
    %s641 = smul.addr %s640, 8
    %s642 = scalar_lea.vmem [#allocation2], %s641
    %v643 = vld [vmem:[%s642] sm:$0xff]
    %v644 = vld [vmem:[%s642 + $0x8] sm:$0xff]
    %v645 = vpack.c.bf16 %v639, %v639
    %v647 = vsel %vm270, %v645, 0
    %649 = vmatprep.subr.bf16.mxu0 %v255
    %650 = vmatpush1.bf16.msra.mxu0 %v254
    %651 = vmatprep.subr.bf16.mxu0 %v257
    %652 = vmatpush1.bf16.msra.mxu0 %v256
    %653 = vmatprep.subr.bf16.mxu0 %v259
    %654 = vmatpush1.bf16.msra.mxu0 %v258
    %655 = vmatprep.subr.bf16.mxu0 %v261
    %656 = vmatpush1.bf16.msra.mxu0 %v260
    %657 = vmatprep.subr.bf16.mxu0 0
    %658 = vmatpush1.bf16.msra.mxu0 0
    %659 = vmatprep.subr.bf16.mxu0 0
    %660 = vmatpush1.bf16.msra.mxu0 0
    %661 = vmatprep.subr.bf16.mxu0 0
    %662 = vmatpush1.bf16.msra.mxu0 0
    %663 = vmatprep.subr.bf16.mxu0 0
    %664 = vmatpush1.bf16.msra.mxu0 0
    %665 = vmatprep.subr.bf16.mxu0 0
    %666 = vmatpush1.bf16.msra.mxu0 0
    %667 = vmatprep.subr.bf16.mxu0 0
    %668 = vmatpush1.bf16.msra.mxu0 0
    %669 = vmatprep.subr.bf16.mxu0 0
    %670 = vmatpush1.bf16.msra.mxu0 0
    %671 = vmatprep.subr.bf16.mxu0 0
    %672 = vmatpush1.bf16.msra.mxu0 0
    %673 = vmatprep.subr.bf16.mxu0 0
    %674 = vmatpush1.bf16.msra.mxu0 0
    %675 = vmatprep.subr.bf16.mxu0 0
    %676 = vmatpush1.bf16.msra.mxu0 0
    %677 = vmatprep.subr.bf16.mxu0 0
    %678 = vmatpush1.bf16.msra.mxu0 0
    %679 = vmatprep.subr.bf16.mxu0 0
    %680 = vmatpush1.bf16.msra.mxu0 0
    %681 = vmatprep.mubr.bf16.mxu0 0
    %682 = vmatmul.mubr.bf16.gmra.mrb[0].mxu0 %v647
    %v683 = vpop.f32.mrb[0].mxu0
    %v684 = vadd.f32 0.0, %v683
    %v685 = vpop.f32.mrb[0].mxu0
    %v686 = vadd.f32 0.0, %v685
    %v687 = vpop.f32.mrb[0].mxu0
    %v688 = vpop.f32.mrb[0].mxu0
    %689 = vdwg.mxu0
    %v690 = vadd.f32 %v643, %v684
    %v691 = vadd.f32 %v644, %v686
    %v692 = vtanh.pop %v690
    %v693 = vtanh.pop %v691
    %v694 = vmul.f32 %v692, %v213
    %v695 = vmul.f32 %v693, %v214
    %v696 = vadd.f32 %v694, %v215
    %v697 = vadd.f32 %v695, %v216
    %v698 = vmul.f32 %v696, %v633
    %700 = vrot.lane.b32.xlu0 %v697, 64
    %v701 = vpop.permute.xlu0 %700
    %v703 = vmul.f32 %v696, %v701
    %705 = vrot.lane.b32.xlu0 %v703, 64
    %v706 = vpop.permute.xlu0 %705
    %v708 = vadd.f32 %v698, %v706
    %v709 = vtanh.pop %v708
    %711 = vrot.lane.b32.xlu0 %v709, 64
    %v712 = vpop.permute.xlu0 %711
    %v714 = vmul.f32 %v697, %v712
    %s715 = smul.u32 6, 2
    %s716 = smul.addr %s715, 8
    %s717 = scalar_lea.vmem [#allocation2], %s716
    %v718 = vld [vmem:[%s717] sm:$0xff]
    %v719 = vld [vmem:[%s717 + $0x8] sm:$0xff]
    %v720 = vpack.c.bf16 %v714, %v714
    %v722 = vsel %vm270, %v720, 0
    %724 = vmatprep.subr.bf16.mxu0 %v255
    %725 = vmatpush1.bf16.msra.mxu0 %v254
    %726 = vmatprep.subr.bf16.mxu0 %v257
    %727 = vmatpush1.bf16.msra.mxu0 %v256
    %728 = vmatprep.subr.bf16.mxu0 %v259
    %729 = vmatpush1.bf16.msra.mxu0 %v258
    %730 = vmatprep.subr.bf16.mxu0 %v261
    %731 = vmatpush1.bf16.msra.mxu0 %v260
    %732 = vmatprep.subr.bf16.mxu0 0
    %733 = vmatpush1.bf16.msra.mxu0 0
    %734 = vmatprep.subr.bf16.mxu0 0
    %735 = vmatpush1.bf16.msra.mxu0 0
    %736 = vmatprep.subr.bf16.mxu0 0
    %737 = vmatpush1.bf16.msra.mxu0 0
    %738 = vmatprep.subr.bf16.mxu0 0
    %739 = vmatpush1.bf16.msra.mxu0 0
    %740 = vmatprep.subr.bf16.mxu0 0
    %741 = vmatpush1.bf16.msra.mxu0 0
    %742 = vmatprep.subr.bf16.mxu0 0
    %743 = vmatpush1.bf16.msra.mxu0 0
    %744 = vmatprep.subr.bf16.mxu0 0
    %745 = vmatpush1.bf16.msra.mxu0 0
    %746 = vmatprep.subr.bf16.mxu0 0
    %747 = vmatpush1.bf16.msra.mxu0 0
    %748 = vmatprep.subr.bf16.mxu0 0
    %749 = vmatpush1.bf16.msra.mxu0 0
    %750 = vmatprep.subr.bf16.mxu0 0
    %751 = vmatpush1.bf16.msra.mxu0 0
    %752 = vmatprep.subr.bf16.mxu0 0
    %753 = vmatpush1.bf16.msra.mxu0 0
    %754 = vmatprep.subr.bf16.mxu0 0
    %755 = vmatpush1.bf16.msra.mxu0 0
    %756 = vmatprep.mubr.bf16.mxu0 0
    %757 = vmatmul.mubr.bf16.gmra.mrb[0].mxu0 %v722
    %v758 = vpop.f32.mrb[0].mxu0
    %v759 = vadd.f32 0.0, %v758
    %v760 = vpop.f32.mrb[0].mxu0
    %v761 = vadd.f32 0.0, %v760
    %v762 = vpop.f32.mrb[0].mxu0
    %v763 = vpop.f32.mrb[0].mxu0
    %764 = vdwg.mxu0
    %v765 = vadd.f32 %v718, %v759
    %v766 = vadd.f32 %v719, %v761
    %v767 = vtanh.pop %v765
    %v768 = vtanh.pop %v766
    %v769 = vmul.f32 %v767, %v213
    %v770 = vmul.f32 %v768, %v214
    %v771 = vadd.f32 %v769, %v215
    %v772 = vadd.f32 %v770, %v216
    %v773 = vmul.f32 %v771, %v708
    %775 = vrot.lane.b32.xlu0 %v772, 64
    %v776 = vpop.permute.xlu0 %775
    %v778 = vmul.f32 %v771, %v776
    %780 = vrot.lane.b32.xlu0 %v778, 64
    %v781 = vpop.permute.xlu0 %780
    %v783 = vadd.f32 %v773, %v781
    %v784 = vtanh.pop %v783
    %786 = vrot.lane.b32.xlu0 %v784, 64
    %v787 = vpop.permute.xlu0 %786
    %v789 = vmul.f32 %v772, %v787
    %s790 = smul.u32 7, 2
    %s791 = smul.addr %s790, 8
    %s792 = scalar_lea.vmem [#allocation2], %s791
    %v793 = vld [vmem:[%s792] sm:$0xff]
    %v794 = vld [vmem:[%s792 + $0x8] sm:$0xff]
    %v795 = vpack.c.bf16 %v789, %v789
    %v797 = vsel %vm270, %v795, 0
    %799 = vmatprep.subr.bf16.mxu0 %v255
    %800 = vmatpush1.bf16.msra.mxu0 %v254
    %801 = vmatprep.subr.bf16.mxu0 %v257
    %802 = vmatpush1.bf16.msra.mxu0 %v256
    %803 = vmatprep.subr.bf16.mxu0 %v259
    %804 = vmatpush1.bf16.msra.mxu0 %v258
    %805 = vmatprep.subr.bf16.mxu0 %v261
    %806 = vmatpush1.bf16.msra.mxu0 %v260
    %807 = vmatprep.subr.bf16.mxu0 0
    %808 = vmatpush1.bf16.msra.mxu0 0
    %809 = vmatprep.subr.bf16.mxu0 0
    %810 = vmatpush1.bf16.msra.mxu0 0
    %811 = vmatprep.subr.bf16.mxu0 0
    %812 = vmatpush1.bf16.msra.mxu0 0
    %813 = vmatprep.subr.bf16.mxu0 0
    %814 = vmatpush1.bf16.msra.mxu0 0
    %815 = vmatprep.subr.bf16.mxu0 0
    %816 = vmatpush1.bf16.msra.mxu0 0
    %817 = vmatprep.subr.bf16.mxu0 0
    %818 = vmatpush1.bf16.msra.mxu0 0
    %819 = vmatprep.subr.bf16.mxu0 0
    %820 = vmatpush1.bf16.msra.mxu0 0
    %821 = vmatprep.subr.bf16.mxu0 0
    %822 = vmatpush1.bf16.msra.mxu0 0
    %823 = vmatprep.subr.bf16.mxu0 0
    %824 = vmatpush1.bf16.msra.mxu0 0
    %825 = vmatprep.subr.bf16.mxu0 0
    %826 = vmatpush1.bf16.msra.mxu0 0
    %827 = vmatprep.subr.bf16.mxu0 0
    %828 = vmatpush1.bf16.msra.mxu0 0
    %829 = vmatprep.subr.bf16.mxu0 0
    %830 = vmatpush1.bf16.msra.mxu0 0
    %831 = vmatprep.mubr.bf16.mxu0 0
    %832 = vmatmul.mubr.bf16.gmra.mrb[0].mxu0 %v797
    %v833 = vpop.f32.mrb[0].mxu0
    %v834 = vadd.f32 0.0, %v833
    %v835 = vpop.f32.mrb[0].mxu0
    %v836 = vadd.f32 0.0, %v835
    %v837 = vpop.f32.mrb[0].mxu0
    %v838 = vpop.f32.mrb[0].mxu0
    %839 = vdwg.mxu0
    %v840 = vadd.f32 %v793, %v834
    %v841 = vadd.f32 %v794, %v836
    %v842 = vtanh.pop %v840
    %v843 = vtanh.pop %v841
    %v844 = vmul.f32 %v842, %v213
    %v845 = vmul.f32 %v843, %v214
    %v846 = vadd.f32 %v844, %v215
    %v847 = vadd.f32 %v845, %v216
    %v848 = vmul.f32 %v846, %v783
    %850 = vrot.lane.b32.xlu0 %v847, 64
    %v851 = vpop.permute.xlu0 %850
    %v853 = vmul.f32 %v846, %v851
    %855 = vrot.lane.b32.xlu0 %v853, 64
    %v856 = vpop.permute.xlu0 %855
    %v858 = vadd.f32 %v848, %v856
    %v859 = vtanh.pop %v858
    %861 = vrot.lane.b32.xlu0 %v859, 64
    %v862 = vpop.permute.xlu0 %861
    %v864 = vmul.f32 %v847, %v862
    %865 = vst.msk [vmem:[#allocation3] sm:$0xff] %vm270, %v864
    // Predicated region
    $region18: #{tpu_custom_call.1} parent=1 // pred_check
      _
    $region19: #{tpu_custom_call.1} parent=1 // pred_check_branch
      %867 = sbr.rel (0) target = $region21
    $region20: #{tpu_custom_call.1} parent=1 // pred_region
      %s869 = ssub.s32 128, 128
      %870 = vsyncadd [#allocation4], %s869
      %s872 = sshll.u32 [#allocation3], 4
      %s873 = int_to_ptr.vmem [resolvable:$true] %s872
      %875 = dma.vmem_to_hbm [thread:$0]  %s873, 128, %s4, [#allocation4]
    $region21: #{tpu_custom_call.1} parent=1 // pred_fallthru
      _
    // Predicated region
    $region22: #{tpu_custom_call.1} parent=1 // pred_check
      _
    $region23: #{tpu_custom_call.1} parent=1 // pred_check_branch
      %877 = sbr.rel (0) target = $region25
    $region24: #{tpu_custom_call.1} parent=1 // pred_region
      %878 = dma.done [#allocation4], 128
    $region25: #{tpu_custom_call.1} parent=1 // pred_fallthru
      _
    %879 = vsyncpa [#allocation4], 1

</llo_original>
